<compile_context>
chip_gen: v7x
topology: tpu7x:2x2x1
jax: 0.10.0
libtpu: 0.0.40
codegen_flags: <defaults>
</compile_context>

<pallas_src>
import functools

import jax
import jax.numpy as jnp
from jax.experimental import pallas as pl
from jax.experimental.pallas import tpu as pltpu


def _round_up(x: int, m: int) -> int:
    return ((x + m - 1) // m) * m


def _pick_v_tile(V: int, max_tile: int) -> int:
    """Largest multiple-of-128 tile <= max_tile that divides V (else full V)."""
    if V <= max_tile:
        return V
    t = (max_tile // 128) * 128
    while t >= 128:
        if V % t == 0:
            return t
        t -= 128
    return V


def _decoder_kernel(pad_index, num_v, v_tile,
                    h_ref, w_ref, b_ref, valid_ref, o_ref,
                    max_sc, arg_sc):
    """Row-blocked output projection + online argmax over vocab tiles.

    h_ref:     (rt, E)  bf16   rows = flattened (B, T)
    w_ref:     (E, tV)  bf16   vocab tile of W_out
    b_ref:     (1, tV)  f32    vocab tile of bias
    valid_ref: (1, rt)  int32  1 where pos < lens, else 0
    o_ref:     (1, rt)  int32  output tokens (lane-dense last dim)
    max_sc:    (1, rt)  f32    running max logit per row
    arg_sc:    (1, rt)  int32  running global argmax per row
    """
    v = pl.program_id(1)

    @pl.when(v == 0)
    def _init():
        max_sc[...] = jnp.full_like(max_sc, -jnp.inf)
        arg_sc[...] = jnp.zeros_like(arg_sc)

    rt = h_ref.shape[0]

    # (rt, E) @ (E, tV) on the MXU; bf16 operands, f32 accumulate.
    logits = jnp.dot(h_ref[...], w_ref[...],
                     preferred_element_type=jnp.float32)
    logits = logits + b_ref[...]                                   # (rt, tV)

    # Online argmax across vocab tiles.
    local_max = jnp.max(logits, axis=-1).reshape(1, rt)            # (1, rt)
    local_arg = jnp.argmax(logits, axis=-1).astype(jnp.int32).reshape(1, rt)
    global_arg = local_arg + v * v_tile                            # global col idx

    # Strict ">" => earlier tile wins ties, matching jnp.argmax first-max.
    better = local_max > max_sc[...]
    max_sc[...] = jnp.where(better, local_max, max_sc[...])
    arg_sc[...] = jnp.where(better, global_arg, arg_sc[...])

    @pl.when(v == num_v - 1)
    def _finalize():
        valid = valid_ref[...] != 0
        o_ref[...] = jnp.where(valid, arg_sc[...], jnp.int32(pad_index))


def decoder_forward(z, x, lens, params, *, pad_index,
                    row_tile=256, max_v_tile=2048,
                    compute_dtype=jnp.bfloat16):
    """z: (B, L) f32, x: (B, T) int32, lens: (B,) int -> tokens (B, T) int32."""
    emb_table = params["embedding"]      # (V, E)
    w_z = params["w_z"]                  # (L, E)
    w_out = params["w_out"]              # (E, V)
    b_out = params["b_out"]              # (1, V)

    B, T = x.shape
    E = emb_table.shape[1]
    V = w_out.shape[1]
    R = B * T

    # --- hoisted latent projection, fused with the embedding gather (XLA) ---
    zw = jnp.dot(z, w_z, preferred_element_type=jnp.float32)       # (B, E)
    h = emb_table[x] + zw[:, None, :]                              # (B, T, E)
    h_rows = h.reshape(R, E).astype(compute_dtype)                 # (R, E)

    # --- row tiling: tall LHS per grid step ---
    rt = min(row_tile, _round_up(R, 8))
    Rp = _round_up(R, rt)
    if Rp != R:
        h_rows = jnp.pad(h_rows, ((0, Rp - R), (0, 0)))
    n_r = Rp // rt

    # Length mask (pos < lens), flattened row-major to match h_rows.
    pos = jnp.arange(T, dtype=jnp.int32)[None, :]
    valid = (pos < lens.astype(jnp.int32)[:, None]).astype(jnp.int32).reshape(R)
    valid = jnp.pad(valid, (0, Rp - R)).reshape(n_r, rt)

    # --- vocab tiling ---
    tV = _pick_v_tile(V, max_v_tile)
    n_v = V // tV

    w_c = w_out.astype(compute_dtype)
    b_c = b_out.astype(jnp.float32)

    kernel = functools.partial(_decoder_kernel, pad_index, n_v, tV)

    grid_spec = pltpu.PrefetchScalarGridSpec(
        num_scalar_prefetch=0,
        grid=(n_r, n_v),                                # rows parallel, V arbitrary
        in_specs=[
            pl.BlockSpec((rt, E), lambda r, v: (r, 0)),   # h rows (bf16)
            pl.BlockSpec((E, tV), lambda r, v: (0, v)),   # W_out vocab tile (bf16)
            pl.BlockSpec((1, tV), lambda r, v: (0, v)),   # bias vocab tile (f32)
            pl.BlockSpec((1, rt), lambda r, v: (r, 0)),   # validity mask
        ],
        out_specs=pl.BlockSpec((1, rt), lambda r, v: (r, 0)),
        scratch_shapes=[pltpu.VMEM((1, rt), jnp.float32),   # running max
                        pltpu.VMEM((1, rt), jnp.int32)],    # running argmax
    )

    # Explicit VMEM limit: ~0.75x physical, capped at 96 MiB (=> ~48 MiB on v7x).
    try:
        phys_vmem = int(pltpu.get_tpu_info().vmem_capacity_bytes)
    except Exception:
        phys_vmem = 64 * 1024 * 1024
    vmem_limit = int(min(0.75 * phys_vmem, 96 * 1024 * 1024))

    tokens = pl.pallas_call(
        kernel,
        out_shape=jax.ShapeDtypeStruct((n_r, rt), jnp.int32),
        grid_spec=grid_spec,
        compiler_params=pltpu.CompilerParams(
            dimension_semantics=("parallel", "arbitrary"),
            vmem_limit_bytes=vmem_limit),
    )(h_rows, w_c, b_c, valid)

    return tokens.reshape(Rp)[:R].reshape(B, T)


def decoder_forward_ref(z, x, lens, params, *, pad_index,
                        compute_dtype=jnp.bfloat16):
    """Pure-JAX reference (same compute dtype as the kernel's MXU path)."""
    emb = params["embedding"][x]                                   # (B, T, E)
    h = emb + (z @ params["w_z"])[:, None, :]                      # (B, T, E)
    logits = jnp.dot(h.astype(compute_dtype),
                     params["w_out"].astype(compute_dtype),
                     preferred_element_type=jnp.float32)
    logits = logits + params["b_out"][None].astype(jnp.float32)    # (B, T, V)
    tok = jnp.argmax(logits, axis=-1).astype(jnp.int32)
    pos = jnp.arange(x.shape[1], dtype=jnp.int32)[None, :]
    return jnp.where(pos < lens[:, None].astype(jnp.int32), tok,
                     jnp.int32(pad_index))


if __name__ == "__main__":
    # Module hyperparameters (small, consistent with __init__ signature)
    vocab_dim = 128
    max_sequence_length = 8
    latent_dim = 32
    embedding_dim = 32
    sos_index, eos_index, pad_index, unk_index = 1, 2, 0, 3
    B = 2

    key = jax.random.PRNGKey(0)
    k_emb, k_wz, k_wout, k_b, k_x, k_z, k_lens = jax.random.split(key, 7)

    params = {
        "embedding": jax.random.normal(k_emb, (vocab_dim, embedding_dim),
                                       jnp.float32) * 0.1,
        "w_z": jax.random.normal(k_wz, (latent_dim, embedding_dim),
                                 jnp.float32) * 0.1,
        "w_out": jax.random.normal(k_wout, (embedding_dim, vocab_dim),
                                   jnp.float32) * 0.1,
        "b_out": jax.random.normal(k_b, (1, vocab_dim), jnp.float32) * 0.1,
    }

    x = jax.random.randint(k_x, (B, max_sequence_length), 0, vocab_dim,
                           dtype=jnp.int32)
    z = jax.random.normal(k_z, (B, latent_dim), jnp.float32)
    lens = jnp.array([max_sequence_length, 5], dtype=jnp.int32)

    out = decoder_forward(z, x, lens, params, pad_index=pad_index)
    out = jax.block_until_ready(out)

    ref = decoder_forward_ref(z, x, lens, params, pad_index=pad_index)
    assert out.shape == (B, max_sequence_length)
    assert out.dtype == jnp.int32
    assert bool(jnp.all(out == ref)), f"mismatch:\n{out}\nvs\n{ref}"

    print("KERNEL_OK")
</pallas_src>

<mosaic_0001>
module attributes {stable_mosaic.version = 11 : i64} {
  func.func @_decoder_kernel(%arg0: i32, %arg1: i32, %arg2: memref<16x32xbf16, #tpu.memory_space<vmem>>, %arg3: memref<32x128xbf16, #tpu.memory_space<vmem>>, %arg4: memref<1x128xf32, #tpu.memory_space<vmem>>, %arg5: memref<1x16xi32, #tpu.memory_space<vmem>>, %arg6: memref<1x16xi32, #tpu.memory_space<vmem>>, %arg7: memref<1x16xf32, #tpu.memory_space<vmem>>, %arg8: memref<1x16xi32, #tpu.memory_space<vmem>>) attributes {dimension_semantics = [#tpu.dimension_semantics<parallel>, #tpu.dimension_semantics<arbitrary>], iteration_bounds = array<i64: 1, 1>, scalar_prefetch = 0 : i64, scratch_operands = 2 : i64, tpu.core_type = #tpu.core_type<tc>, window_params = [{transform_indices = @transform_0, window_bounds = array<i64: 16, 32>}, {transform_indices = @transform_1, window_bounds = array<i64: 32, 128>}, {transform_indices = @transform_2, window_bounds = array<i64: 1, 128>}, {transform_indices = @transform_3, window_bounds = array<i64: 1, 16>}, {transform_indices = @transform_4, window_bounds = array<i64: 1, 16>}]} {
    %c0_i32 = arith.constant 0 : i32
    %0 = arith.cmpi eq, %arg1, %c0_i32 : i32
    %1 = arith.extui %0 : i1 to i32
    %c0_i32_0 = arith.constant 0 : i32
    %2 = arith.cmpi ne, %1, %c0_i32_0 : i32
    scf.if %2 {
      %cst_19 = arith.constant 0xFF800000 : f32
      %27 = vector.broadcast %cst_19 : f32 to vector<1x16xf32>
      %c0_20 = arith.constant 0 : index
      %c0_21 = arith.constant 0 : index
      %28 = vector.load %arg7[%c0_20, %c0_21] : memref<1x16xf32, #tpu.memory_space<vmem>>, vector<1x16xf32>
      tpu.vector_store %arg7[%c0_20, %c0_21], %27 {strides = array<i32>} : memref<1x16xf32, #tpu.memory_space<vmem>>, vector<1x16xf32>,
      %c0_i32_22 = arith.constant 0 : i32
      %29 = vector.broadcast %c0_i32_22 : i32 to vector<1x16xi32>
      %c0_23 = arith.constant 0 : index
      %c0_24 = arith.constant 0 : index
      %30 = vector.load %arg8[%c0_23, %c0_24] : memref<1x16xi32, #tpu.memory_space<vmem>>, vector<1x16xi32>
      tpu.vector_store %arg8[%c0_23, %c0_24], %29 {strides = array<i32>} : memref<1x16xi32, #tpu.memory_space<vmem>>, vector<1x16xi32>,
    } else {
    }
    %c0 = arith.constant 0 : index
    %c0_1 = arith.constant 0 : index
    %3 = vector.load %arg2[%c0, %c0_1] : memref<16x32xbf16, #tpu.memory_space<vmem>>, vector<16x32xbf16>
    %c0_2 = arith.constant 0 : index
    %c0_3 = arith.constant 0 : index
    %4 = vector.load %arg3[%c0_2, %c0_3] : memref<32x128xbf16, #tpu.memory_space<vmem>>, vector<32x128xbf16>
    %cst = arith.constant dense<0.000000e+00> : vector<16x128xf32>
    %5 = tpu.matmul %3, %4, %cst {dimension_numbers = #tpu.dot_dimension_numbers<[1], [0], [0], [1], [0, 0, 1, 1], [], []>} : vector<16x32xbf16>, vector<32x128xbf16>, vector<16x128xf32> -> vector<16x128xf32>
    %c0_4 = arith.constant 0 : index
    %c0_5 = arith.constant 0 : index
    %6 = vector.load %arg4[%c0_4, %c0_5] : memref<1x128xf32, #tpu.memory_space<vmem>>, vector<1x128xf32>
    %7 = vector.broadcast %6 : vector<1x128xf32> to vector<16x128xf32>
    %8 = arith.addf %5, %7 : vector<16x128xf32>
    %cst_6 = arith.constant dense<0xFF800000> : vector<16xf32>
    %9 = vector.multi_reduction <maximumf>, %8, %cst_6 [1] : vector<16x128xf32> to vector<16xf32>
    %10 = vector.shape_cast %9 : vector<16xf32> to vector<1x16xf32>
    %11 = tpu.reduce_index %8 {axis = 1 : i32, kind = #tpu.reduction_kind<arg_max>} : vector<16x128xf32> -> vector<16xi32>
    %12 = vector.shape_cast %11 : vector<16xi32> to vector<1x16xi32>
    %c128_i32 = arith.constant 128 : i32
    %13 = arith.muli %arg1, %c128_i32 : i32
    %14 = vector.broadcast %13 : i32 to vector<1x16xi32>
    %15 = arith.addi %12, %14 : vector<1x16xi32>
    %c0_7 = arith.constant 0 : index
    %c0_8 = arith.constant 0 : index
    %16 = vector.load %arg7[%c0_7, %c0_8] : memref<1x16xf32, #tpu.memory_space<vmem>>, vector<1x16xf32>
    %17 = arith.cmpf ogt, %10, %16 : vector<1x16xf32>
    %c0_9 = arith.constant 0 : index
    %c0_10 = arith.constant 0 : index
    %18 = vector.load %arg7[%c0_9, %c0_10] : memref<1x16xf32, #tpu.memory_space<vmem>>, vector<1x16xf32>
    %19 = arith.select %17, %10, %18 : vector<1x16xi1>, vector<1x16xf32>
    %c0_11 = arith.constant 0 : index
    %c0_12 = arith.constant 0 : index
    %20 = vector.load %arg7[%c0_11, %c0_12] : memref<1x16xf32, #tpu.memory_space<vmem>>, vector<1x16xf32>
    tpu.vector_store %arg7[%c0_11, %c0_12], %19 {strides = array<i32>} : memref<1x16xf32, #tpu.memory_space<vmem>>, vector<1x16xf32>,
    %c0_13 = arith.constant 0 : index
    %c0_14 = arith.constant 0 : index
    %21 = vector.load %arg8[%c0_13, %c0_14] : memref<1x16xi32, #tpu.memory_space<vmem>>, vector<1x16xi32>
    %22 = arith.select %17, %15, %21 : vector<1x16xi1>, vector<1x16xi32>
    %c0_15 = arith.constant 0 : index
    %c0_16 = arith.constant 0 : index
    %23 = vector.load %arg8[%c0_15, %c0_16] : memref<1x16xi32, #tpu.memory_space<vmem>>, vector<1x16xi32>
    tpu.vector_store %arg8[%c0_15, %c0_16], %22 {strides = array<i32>} : memref<1x16xi32, #tpu.memory_space<vmem>>, vector<1x16xi32>,
    %c0_i32_17 = arith.constant 0 : i32
    %24 = arith.cmpi eq, %arg1, %c0_i32_17 : i32
    %25 = arith.extui %24 : i1 to i32
    %c0_i32_18 = arith.constant 0 : i32
    %26 = arith.cmpi ne, %25, %c0_i32_18 : i32
    scf.if %26 {
      %c0_19 = arith.constant 0 : index
      %c0_20 = arith.constant 0 : index
      %27 = vector.load %arg5[%c0_19, %c0_20] : memref<1x16xi32, #tpu.memory_space<vmem>>, vector<1x16xi32>
      %c0_i32_21 = arith.constant 0 : i32
      %28 = vector.broadcast %c0_i32_21 : i32 to vector<1x16xi32>
      %29 = arith.cmpi ne, %27, %28 : vector<1x16xi32>
      %c0_22 = arith.constant 0 : index
      %c0_23 = arith.constant 0 : index
      %30 = vector.load %arg8[%c0_22, %c0_23] : memref<1x16xi32, #tpu.memory_space<vmem>>, vector<1x16xi32>
      %c0_i32_24 = arith.constant 0 : i32
      %31 = vector.broadcast %c0_i32_24 : i32 to vector<1x16xi32>
      %32 = arith.select %29, %30, %31 : vector<1x16xi1>, vector<1x16xi32>
      %c0_25 = arith.constant 0 : index
      %c0_26 = arith.constant 0 : index
      %33 = vector.load %arg6[%c0_25, %c0_26] : memref<1x16xi32, #tpu.memory_space<vmem>>, vector<1x16xi32>
      tpu.vector_store %arg6[%c0_25, %c0_26], %32 {strides = array<i32>} : memref<1x16xi32, #tpu.memory_space<vmem>>, vector<1x16xi32>,
    } else {
    }
    return
  }
  func.func @transform_0(%arg0: i32, %arg1: i32) -> (i32, i32) {
    %c0_i32 = arith.constant 0 : i32
    %c0_i32_0 = arith.constant 0 : i32
    return %arg0, %c0_i32 : i32, i32
  }
  func.func @transform_1(%arg0: i32, %arg1: i32) -> (i32, i32) {
    %c0_i32 = arith.constant 0 : i32
    %c0_i32_0 = arith.constant 0 : i32
    return %c0_i32, %arg1 : i32, i32
  }
  func.func @transform_2(%arg0: i32, %arg1: i32) -> (i32, i32) {
    %c0_i32 = arith.constant 0 : i32
    %c0_i32_0 = arith.constant 0 : i32
    return %c0_i32, %arg1 : i32, i32
  }
  func.func @transform_3(%arg0: i32, %arg1: i32) -> (i32, i32) {
    %c0_i32 = arith.constant 0 : i32
    %c0_i32_0 = arith.constant 0 : i32
    return %arg0, %c0_i32 : i32, i32
  }
  func.func @transform_4(%arg0: i32, %arg1: i32) -> (i32, i32) {
    %c0_i32 = arith.constant 0 : i32
    %c0_i32_0 = arith.constant 0 : i32
    return %arg0, %c0_i32 : i32, i32
  }
}

</mosaic_0001>

<llo_original>
// kernel: tpu_custom_call.1
$region0: #{tpu_custom_call.1}
  #allocation0 [shape = 'u32[]', space=smem, size = 0x4, offset = 0x4, fixed_abs, tag = 'smem constant byte address 0x4 - core index']
  #allocation1 [shape = 'u32[144,128]{1,0:T(1,128)}', space=vmem, size = 0x12000, scoped, tag = 'internal scratch']
  #allocation2 [shape = 'f32[1,16]{1,0:T(1,128)}', space=vmem, size = 0x200, scoped, tag = 'scratch operand']
  #allocation3 [shape = 's32[1,16]{1,0:T(1,128)}', space=vmem, size = 0x200, scoped, tag = 'scratch operand']
  %s0 = inlined_call_operand.hbm [shape: bf16[16,32], index: 0, kind: input, shape index: {}]
  %s1 = inlined_call_operand.hbm [shape: bf16[32,128], index: 1, kind: input, shape index: {}]
  %s2 = inlined_call_operand.vmem [shape: f32[1,128], index: 2, kind: input, shape index: {}]
  %s3 = inlined_call_operand.vmem [shape: s32[1,16], index: 3, kind: input, shape index: {}]
  %s4 = inlined_call_operand.hbm [shape: s32[1,16], index: 4, kind: output, shape index: {}]
  %s5 = sld [smem:[#allocation0]]
  $region42: #{tpu_custom_call.1} parent=0
    _
  %s7 = ssub.s32 1, %s5
  %s8 = scalar_select 0, %s7, %s5
  $region1: #{tpu_custom_call.1} parent=0
    #allocation4 [shape = 'u8[4096]{0}', space=vmem, size = 0x1000, scoped, tag = 'input window, operand 0, single buffered']
    #allocation5 [shape = 's32[1]{0}', space=sflag, size = 0x4, scoped, tag = 'scoped memory for tpu_custom_call.1']
    #allocation6 [shape = 's32[1]{0}', space=sflag, size = 0x4, scoped, tag = 'scoped memory for tpu_custom_call.1']
    #allocation7 [shape = 'u8[8192]{0}', space=vmem, size = 0x2000, scoped, tag = 'input window, operand 1, single buffered']
    #allocation8 [shape = 's32[1]{0}', space=sflag, size = 0x4, scoped, tag = 'scoped memory for tpu_custom_call.1']
    #allocation9 [shape = 'u8[512]{0}', space=vmem, size = 0x400, scoped, tag = 'output window, operand 0, single buffered']
    %9 = vsyncpa [#allocation5], 0
    %10 = vsyncpa [#allocation8], 0
    %11 = vsyncpa [#allocation6], 0
    // Predicated region
    $region2: #{tpu_custom_call.1} parent=1 // pred_check
      _
    $region3: #{tpu_custom_call.1} parent=1 // pred_check_branch
      %13 = sbr.rel (0) target = $region5
    $region4: #{tpu_custom_call.1} parent=1 // pred_region
      %s15 = ssub.s32 128, 128
      %16 = vsyncadd [#allocation5], %s15
      %s17 = sshll.u32 [#allocation4], 4
      %s18 = int_to_ptr.vmem [resolvable:$true] %s17
      %23 = dma.hbm_to_vmem [thread:$0]  %s0, 128, %s18, [#allocation5], 64, 64, 4
    $region5: #{tpu_custom_call.1} parent=1 // pred_fallthru
      _
    // Predicated region
    $region6: #{tpu_custom_call.1} parent=1 // pred_check
      _
    $region7: #{tpu_custom_call.1} parent=1 // pred_check_branch
      %25 = sbr.rel (0) target = $region9
    $region8: #{tpu_custom_call.1} parent=1 // pred_region
      %s27 = ssub.s32 256, 256
      %28 = vsyncadd [#allocation8], %s27
      %s29 = sshll.u32 [#allocation7], 4
      %s30 = int_to_ptr.vmem [resolvable:$true] %s29
      %35 = dma.hbm_to_vmem [thread:$0]  %s1, 256, %s30, [#allocation8], 64, 64, 4
    $region9: #{tpu_custom_call.1} parent=1 // pred_fallthru
      _
    // Predicated region
    $region10: #{tpu_custom_call.1} parent=1 // pred_check
      _
    $region11: #{tpu_custom_call.1} parent=1 // pred_check_branch
      %37 = sbr.rel (0) target = $region13
    $region12: #{tpu_custom_call.1} parent=1 // pred_region
      _
    $region13: #{tpu_custom_call.1} parent=1 // pred_fallthru
      _
    // Predicated region
    $region14: #{tpu_custom_call.1} parent=1 // pred_check
      _
    $region15: #{tpu_custom_call.1} parent=1 // pred_check_branch
      %39 = sbr.rel (0) target = $region17
    $region16: #{tpu_custom_call.1} parent=1 // pred_region
      _
    $region17: #{tpu_custom_call.1} parent=1 // pred_fallthru
      _
    // Predicated region
    $region18: #{tpu_custom_call.1} parent=1 // pred_check
      _
    $region19: #{tpu_custom_call.1} parent=1 // pred_check_branch
      %41 = sbr.rel (0) target = $region21
    $region20: #{tpu_custom_call.1} parent=1 // pred_region
      %42 = dma.done [#allocation5], 128
    $region21: #{tpu_custom_call.1} parent=1 // pred_fallthru
      _
    // Predicated region
    $region22: #{tpu_custom_call.1} parent=1 // pred_check
      _
    $region23: #{tpu_custom_call.1} parent=1 // pred_check_branch
      %44 = sbr.rel (0) target = $region25
    $region24: #{tpu_custom_call.1} parent=1 // pred_region
      %45 = dma.done [#allocation8], 256
    $region25: #{tpu_custom_call.1} parent=1 // pred_fallthru
      _
    %p47 = scmp.eq.s32.totalorder 0, 0
    // Predicated region
    $region26: #{tpu_custom_call.1} parent=1 // pred_check
      %p48 = pneg %p47
    $region27: #{tpu_custom_call.1} parent=1 // pred_check_branch
      %50 = sbr.rel (%p48) target = $region29
    $region28: #{tpu_custom_call.1} parent=1 // pred_region
      %vm51 = vcmask 122880
      %52 = vst.msk [vmem:[#allocation2] sm:$0x1] %vm51, -inf
      %53 = vst.msk [vmem:[#allocation3] sm:$0x1] %vm51, 0
    $region29: #{tpu_custom_call.1} parent=1 // pred_fallthru
      _
    %v54 = vld [vmem:[#allocation4] sm:$0xf]
    %v55 = vld [vmem:[#allocation4 + $0x4] sm:$0xf]
    %v56 = vld [vmem:[#allocation7] sm:$0xf]
    %v57 = vld [vmem:[#allocation7 + $0x4] sm:$0xf]
    %v58 = vld [vmem:[#allocation7 + $0x8] sm:$0xf]
    %v59 = vld [vmem:[#allocation7 + $0xc] sm:$0xf]
    %v60 = vld [vmem:[%s2] sm:$0x1]
    %v62 = vlaneseq
    %v63 = vshrl.u32 %v62, 7
    %v64 = vsub.s32 0, %v63
    %v65 = vrot.slane %v60, %v64
    %v69 = vunpack.c.l.b16 %v54
    %v70 = vunpack.c.l.b16 %v55
    %v71 = vpack.c.b16 %v70, %v69
    %v76 = vunpack.c.l.b16 %v56
    %v77 = vunpack.c.l.b16 %v57
    %v78 = vunpack.c.l.b16 %v58
    %v79 = vunpack.c.l.b16 %v59
    %v80 = vpack.c.b16 %v77, %v76
    %v81 = vpack.c.b16 %v79, %v78
    %vm84 = vcmask 261120
    %v86 = vsel %vm84, %v71, 0
    %88 = vmatprep.subr.bf16.mxu0 0
    %89 = vmatpush1.bf16.msra.mxu0 %v80
    %90 = vmatprep.subr.bf16.mxu0 0
    %91 = vmatpush1.bf16.msra.mxu0 %v81
    %92 = vmatprep.subr.bf16.mxu0 0
    %93 = vmatpush1.bf16.msra.mxu0 0
    %94 = vmatprep.subr.bf16.mxu0 0
    %95 = vmatpush1.bf16.msra.mxu0 0
    %96 = vmatprep.subr.bf16.mxu0 0
    %97 = vmatpush1.bf16.msra.mxu0 0
    %98 = vmatprep.subr.bf16.mxu0 0
    %99 = vmatpush1.bf16.msra.mxu0 0
    %100 = vmatprep.subr.bf16.mxu0 0
    %101 = vmatpush1.bf16.msra.mxu0 0
    %102 = vmatprep.subr.bf16.mxu0 0
    %103 = vmatpush1.bf16.msra.mxu0 0
    %104 = vmatprep.subr.bf16.mxu0 0
    %105 = vmatpush1.bf16.msra.mxu0 0
    %106 = vmatprep.subr.bf16.mxu0 0
    %107 = vmatpush1.bf16.msra.mxu0 0
    %108 = vmatprep.subr.bf16.mxu0 0
    %109 = vmatpush1.bf16.msra.mxu0 0
    %110 = vmatprep.subr.bf16.mxu0 0
    %111 = vmatpush1.bf16.msra.mxu0 0
    %112 = vmatprep.subr.bf16.mxu0 0
    %113 = vmatpush1.bf16.msra.mxu0 0
    %114 = vmatprep.subr.bf16.mxu0 0
    %115 = vmatpush1.bf16.msra.mxu0 0
    %116 = vmatprep.subr.bf16.mxu0 0
    %117 = vmatpush1.bf16.msra.mxu0 0
    %118 = vmatprep.subr.bf16.mxu0 0
    %119 = vmatpush1.bf16.msra.mxu0 0
    %120 = vmatprep.mubr.bf16.mxu0 0
    %121 = vmatmul.mubr.bf16.gmra.mrb[0].mxu0 %v86
    %v122 = vpop.f32.mrb[0].mxu0
    %v123 = vadd.f32 %v65, %v122
    %v124 = vpop.f32.mrb[0].mxu0
    %v125 = vpop.f32.mrb[0].mxu0
    %v126 = vadd.f32 %v65, %v125
    %v127 = vpop.f32.mrb[0].mxu0
    %128 = vdwg.mxu0
    %129 = vmax.xlane.f32.xlu0 %v123
    %v130 = vpop.xlane.xlu0 %129
    %131 = vmax.xlane.f32.xlu0 %v126
    %v132 = vpop.xlane.xlu0 %131
    %133 = vmax.index.xlane.f32.xlu0 %v123
    %v134 = vpop.xlane.xlu0 %133
    %135 = vmax.index.xlane.f32.xlu0 %v126
    %v136 = vpop.xlane.xlu0 %135
    %s137 = smul.u32 0, 128
    %v138 = vstv %s137
    %v139 = vadd.s32 %v134, %v138
    %v140 = vadd.s32 %v136, %v138
    %v141 = vld [vmem:[#allocation2] sm:$0x1]
    %v143 = vlaneseq
    %v144 = vshrl.u32 %v143, 7
    %v145 = vsub.s32 0, %v144
    %v146 = vrot.slane %v141, %v145
    %148 = vbcast.lane.b32.xlu0 %v146, 256
    %v149 = vpop.permute.xlu0 %148
    %s151 = sor.u32 256, 8
    %152 = vbcast.lane.b32.xlu0 %v146, %s151
    %v153 = vpop.permute.xlu0 %152
    %vm156 = vcmp.gt.f32.partialorder %v130, %v149
    %vm157 = vcmp.gt.f32.partialorder %v132, %v153
    %v158 = vsel %vm156, %v130, %v149
    %v159 = vsel %vm157, %v132, %v153
    %162 = vset.pattern.permute.xlu0 0
    %163 = vperm.xlu0 %162, %v158
    %v164 = vpop.permute.xlu0 %163
    %165 = vset.pattern.permute.xlu0 0
    %166 = vperm.xlu0 %165, %v159
    %v167 = vpop.permute.xlu0 %166
    %v168 = vlaneseq
    %v169 = vand.u32 %v168, 127
    %v170 = vlaneseq
    %v171 = vshrl.u32 %v170, 7
    %v172 = vsub.s32 %v169, %v171
    %v173 = vrot.slane %v164, %v172
    %v174 = vadd.s32 %v169, 4294967288
    %v175 = vlaneseq
    %v176 = vshrl.u32 %v175, 7
    %v177 = vsub.s32 %v174, %v176
    %v178 = vrot.slane %v167, %v177
    %vm179 = vcmask 130112
    %v180 = vsel %vm179, %v178, %v173
    %vm182 = vcmask 122880
    %183 = vst.msk [vmem:[#allocation2] sm:$0x1] %vm182, %v180
    %v184 = vld [vmem:[#allocation3] sm:$0x1]
    %v185 = vlaneseq
    %v186 = vshrl.u32 %v185, 7
    %v187 = vsub.s32 0, %v186
    %v188 = vrot.slane %v184, %v187
    %190 = vbcast.lane.b32.xlu0 %v188, 256
    %v191 = vpop.permute.xlu0 %190
    %s193 = sor.u32 256, 8
    %194 = vbcast.lane.b32.xlu0 %v188, %s193
    %v195 = vpop.permute.xlu0 %194
    %v196 = vsel %vm156, %v139, %v191
    %v197 = vsel %vm157, %v140, %v195
    %198 = vset.pattern.permute.xlu0 0
    %199 = vperm.xlu0 %198, %v196
    %v200 = vpop.permute.xlu0 %199
    %201 = vset.pattern.permute.xlu0 0
    %202 = vperm.xlu0 %201, %v197
    %v203 = vpop.permute.xlu0 %202
    %v204 = vlaneseq
    %v205 = vshrl.u32 %v204, 7
    %v206 = vsub.s32 %v169, %v205
    %v207 = vrot.slane %v200, %v206
    %v208 = vlaneseq
    %v209 = vshrl.u32 %v208, 7
    %v210 = vsub.s32 %v174, %v209
    %v211 = vrot.slane %v203, %v210
    %v212 = vsel %vm179, %v211, %v207
    %213 = vst.msk [vmem:[#allocation3] sm:$0x1] %vm182, %v212
    // Predicated region
    $region30: #{tpu_custom_call.1} parent=1 // pred_check
      %p214 = pneg %p47
    $region31: #{tpu_custom_call.1} parent=1 // pred_check_branch
      %216 = sbr.rel (%p214) target = $region33
    $region32: #{tpu_custom_call.1} parent=1 // pred_region
      %v217 = vld [vmem:[%s3] sm:$0x1]
      %vm218 = vcmp.ne.s32.totalorder %v217, 0
      %v219 = vld [vmem:[#allocation3] sm:$0x1]
      %v220 = vsel %vm218, %v219, 0
      %221 = vst.msk [vmem:[#allocation9] sm:$0x1] %vm182, %v220
    $region33: #{tpu_custom_call.1} parent=1 // pred_fallthru
      _
    // Predicated region
    $region34: #{tpu_custom_call.1} parent=1 // pred_check
      _
    $region35: #{tpu_custom_call.1} parent=1 // pred_check_branch
      %223 = sbr.rel (0) target = $region37
    $region36: #{tpu_custom_call.1} parent=1 // pred_region
      %s225 = ssub.s32 16, 16
      %226 = vsyncadd [#allocation6], %s225
      %s228 = sshll.u32 [#allocation9], 4
      %s229 = int_to_ptr.vmem [resolvable:$true] %s228
      %231 = dma.vmem_to_hbm [thread:$0]  %s229, 16, %s4, [#allocation6]
    $region37: #{tpu_custom_call.1} parent=1 // pred_fallthru
      _
    // Predicated region
    $region38: #{tpu_custom_call.1} parent=1 // pred_check
      _
    $region39: #{tpu_custom_call.1} parent=1 // pred_check_branch
      %233 = sbr.rel (0) target = $region41
    $region40: #{tpu_custom_call.1} parent=1 // pred_region
      %234 = dma.done [#allocation6], 16
    $region41: #{tpu_custom_call.1} parent=1 // pred_fallthru
      _
    %235 = vsyncpa [#allocation5], 1
    %236 = vsyncpa [#allocation8], 1
    %237 = vsyncpa [#allocation6], 1

</llo_original>
